<compile_context>
chip_gen: v5e
topology: v5e:2x2
jax: 0.10.0
libtpu: 0.0.40
codegen_flags: <defaults>
</compile_context>

<pallas_src>
import functools

import jax
import jax.numpy as jnp
from jax.experimental import pallas as pl
from jax.experimental.pallas import tpu as pltpu

STATE_SPACE = 2
HID1 = 128
HID2 = 256
ACTION_SPACE = 7
OUT_PAD = 128          # lane-dense padded width of the last matmul (compute only)


def _round_up(n, m):
    return ((n + m - 1) // m) * m


def policy_kernel(x_ref, w1_ref, b1_ref, w2_ref, b2_ref, w3_ref, b3_ref, o_ref):
    x = x_ref[...]                      # (TB, 2)  f32
    w1 = w1_ref[...]                    # (2, 128) f32

    # Layer 1: Linear(2 -> 128) as VPU broadcast-FMAs (K=2 would waste the
    # MXU), then (Dropout = identity in eval) + ReLU.
    h1 = x[:, 0:1] * w1[0:1, :] + x[:, 1:2] * w1[1:2, :] + b1_ref[...]
    h1 = jnp.maximum(h1, 0.0)

    # Layer 2: Linear(128 -> 256) on the MXU (bf16 inputs, f32 accumulation by
    # default), identity dropout + ReLU.
    h2 = jnp.dot(h1.astype(w2_ref.dtype), w2_ref[...],
                 preferred_element_type=jnp.float32)
    h2 = jnp.maximum(h2 + b2_ref[...], 0.0)

    # Layer 3: Linear(256 -> 7), lane-padded to 128 output columns so the MXU
    # matmul is lane-dense.  Padded w3 columns are zero and padded b3 lanes
    # are -inf (kept f32), so exp() is exactly 0 there and the 128-lane
    # softmax equals the 7-lane one.
    logits = jnp.dot(h2.astype(w3_ref.dtype), w3_ref[...],
                     preferred_element_type=jnp.float32)
    logits = logits + b3_ref[...]

    # Numerically stable softmax; exact reciprocal so rows sum to 1 (f32).
    m = jnp.max(logits, axis=-1, keepdims=True)
    e = jnp.exp(logits - m)
    inv = pl.reciprocal(jnp.sum(e, axis=-1, keepdims=True), approx=False)
    # Narrow (TB, 7) store: ~18x less HBM writeback than a (TB, 128) f32 slab.
    o_ref[...] = (e[:, :ACTION_SPACE] * inv).astype(o_ref.dtype)


def prepare_params(w1, b1, w2, b2, w3, b3, compute_dtype=jnp.bfloat16):
    """One-time parameter prep, hoisted out of the per-call path.

    Weights are stored (in, out) (transposed vs nn.Linear); biases may be
    PyTorch-style (N,) or (1, N).  The two MXU layers default to bf16 inputs
    with f32 accumulation; layer 1 and all biases stay f32.
    """
    b1 = jnp.asarray(b1, jnp.float32).reshape(1, HID1)
    b2 = jnp.asarray(b2, jnp.float32).reshape(1, HID2)
    b3 = jnp.asarray(b3, jnp.float32).reshape(1, ACTION_SPACE)

    w1 = jnp.asarray(w1, jnp.float32)                  # VPU layer: keep f32
    w2 = jnp.asarray(w2).astype(compute_dtype)

    n_pad = OUT_PAD - ACTION_SPACE
    w3p = jnp.pad(jnp.asarray(w3, jnp.float32),
                  ((0, 0), (0, n_pad))).astype(compute_dtype)
    # Keep the -inf padded bias in f32 (never cast -inf through bf16 paths).
    b3p = jnp.concatenate(
        [b3, jnp.full((1, n_pad), -jnp.inf, jnp.float32)], axis=-1)

    return (w1, b1, w2, b2, w3p, b3p)


@functools.partial(jax.jit, static_argnames=("batch_tile",))
def policy_forward(x, params, *, batch_tile=2048):
    w1, b1, w2, b2, w3p, b3p = params
    B = x.shape[0]

    # Batch tile: multiple of 8 sublanes; capped so large batches get >= 2
    # grid steps (keeps both v7x TensorCores busy under "parallel").
    TB = max(8, min(batch_tile, _round_up(-(-B // 2), 8)))
    Bp = _round_up(B, TB)

    x = jnp.asarray(x, jnp.float32)
    xp = x if Bp == B else jnp.pad(x, ((0, Bp - B), (0, 0)))

    def resident(shape):
        # Same block every grid step -> loaded once, stays VMEM-resident.
        return pl.BlockSpec(shape, lambda i: (0,) * len(shape))

    out = pl.pallas_call(
        policy_kernel,
        out_shape=jax.ShapeDtypeStruct((Bp, ACTION_SPACE), jnp.float32),
        grid=(Bp // TB,),
        in_specs=[
            pl.BlockSpec((TB, STATE_SPACE), lambda i: (i, 0)),
            resident(w1.shape), resident(b1.shape),
            resident(w2.shape), resident(b2.shape),
            resident(w3p.shape), resident(b3p.shape),
        ],
        out_specs=pl.BlockSpec((TB, ACTION_SPACE), lambda i: (i, 0)),
        compiler_params=pltpu.CompilerParams(
            dimension_semantics=("parallel",)),
    )(xp, w1, b1, w2, b2, w3p, b3p)

    return out if Bp == B else out[:B]


def init_params(key):
    # Mimics nn.Linear's uniform(-1/sqrt(fan_in), 1/sqrt(fan_in)) init.
    # Weights stored as (in, out); biases PyTorch-style (out,).
    ks = jax.random.split(key, 6)

    def lin(kw, kb, fan_in, fan_out):
        bound = 1.0 / jnp.sqrt(fan_in)
        w = jax.random.uniform(kw, (fan_in, fan_out), jnp.float32, -bound, bound)
        b = jax.random.uniform(kb, (fan_out,), jnp.float32, -bound, bound)
        return w, b

    w1, b1 = lin(ks[0], ks[1], STATE_SPACE, HID1)
    w2, b2 = lin(ks[2], ks[3], HID1, HID2)
    w3, b3 = lin(ks[4], ks[5], HID2, ACTION_SPACE)
    return w1, b1, w2, b2, w3, b3


def reference_forward(x, w1, b1, w2, b2, w3, b3):
    # Plain-JAX f32 reference (eval-mode dropout = identity).
    h1 = jnp.maximum(x @ w1 + b1[None, :], 0.0)
    h2 = jnp.maximum(h1 @ w2 + b2[None, :], 0.0)
    logits = h2 @ w3 + b3[None, :]
    return jax.nn.softmax(logits, axis=-1)


if __name__ == "__main__":
    key = jax.random.PRNGKey(0)
    k_x, k_p = jax.random.split(key)

    w1, b1, w2, b2, w3, b3 = init_params(k_p)

    params_bf16 = prepare_params(w1, b1, w2, b2, w3, b3)                      # default
    params_f32 = prepare_params(w1, b1, w2, b2, w3, b3,
                                compute_dtype=jnp.float32)                    # tight check

    # Small main run (single grid step).
    B = 8
    x = jax.random.normal(k_x, (B, STATE_SPACE), dtype=jnp.float32)
    ref = reference_forward(x, w1, b1, w2, b2, w3, b3)

    out_f32 = jax.block_until_ready(policy_forward(x, params_f32))
    assert out_f32.shape == (B, ACTION_SPACE)
    assert jnp.allclose(out_f32, ref, atol=1e-3, rtol=1e-3)
    assert jnp.allclose(jnp.sum(out_f32, axis=-1), 1.0, atol=1e-3)

    out_bf16 = jax.block_until_ready(policy_forward(x, params_bf16))
    assert out_bf16.shape == (B, ACTION_SPACE)
    assert jnp.allclose(out_bf16, ref, atol=1e-2, rtol=1e-2)
    assert jnp.allclose(jnp.sum(out_bf16, axis=-1), 1.0, atol=1e-3)

    # Exercise batch padding + a multi-step "parallel" grid (B=20, TB=8 -> 3 steps).
    B2 = 20
    x2 = jax.random.normal(jax.random.PRNGKey(1), (B2, STATE_SPACE), jnp.float32)
    out2 = jax.block_until_ready(policy_forward(x2, params_bf16, batch_tile=8))
    ref2 = reference_forward(x2, w1, b1, w2, b2, w3, b3)
    assert out2.shape == (B2, ACTION_SPACE)
    assert jnp.allclose(out2, ref2, atol=1e-2, rtol=1e-2)
    assert jnp.allclose(jnp.sum(out2, axis=-1), 1.0, atol=1e-3)

    print("KERNEL_OK")
</pallas_src>

<mosaic_0001>
module attributes {stable_mosaic.version = 11 : i64} {
  func.func @policy_kernel(%arg0: i32, %arg1: memref<8x2xf32, #tpu.memory_space<vmem>>, %arg2: memref<2x128xf32, #tpu.memory_space<vmem>>, %arg3: memref<1x128xf32, #tpu.memory_space<vmem>>, %arg4: memref<128x256xf32, #tpu.memory_space<vmem>>, %arg5: memref<1x256xf32, #tpu.memory_space<vmem>>, %arg6: memref<256x128xf32, #tpu.memory_space<vmem>>, %arg7: memref<1x128xf32, #tpu.memory_space<vmem>>, %arg8: memref<8x7xf32, #tpu.memory_space<vmem>>) attributes {dimension_semantics = [#tpu.dimension_semantics<parallel>], iteration_bounds = array<i64: 1>, scalar_prefetch = 0 : i64, scratch_operands = 0 : i64, tpu.core_type = #tpu.core_type<tc>, window_params = [{transform_indices = @transform_0, window_bounds = array<i64: 8, 2>}, {pipeline_mode = #tpu.pipeline_mode<synchronous>, transform_indices = @transform_1, window_bounds = array<i64: 2, 128>}, {pipeline_mode = #tpu.pipeline_mode<synchronous>, transform_indices = @transform_2, window_bounds = array<i64: 1, 128>}, {pipeline_mode = #tpu.pipeline_mode<synchronous>, transform_indices = @transform_3, window_bounds = array<i64: 128, 256>}, {pipeline_mode = #tpu.pipeline_mode<synchronous>, transform_indices = @transform_4, window_bounds = array<i64: 1, 256>}, {pipeline_mode = #tpu.pipeline_mode<synchronous>, transform_indices = @transform_5, window_bounds = array<i64: 256, 128>}, {pipeline_mode = #tpu.pipeline_mode<synchronous>, transform_indices = @transform_6, window_bounds = array<i64: 1, 128>}, {transform_indices = @transform_7, window_bounds = array<i64: 8, 7>}]} {
    %c0 = arith.constant 0 : index
    %c0_0 = arith.constant 0 : index
    %0 = vector.load %arg1[%c0, %c0_0] : memref<8x2xf32, #tpu.memory_space<vmem>>, vector<8x2xf32>
    %c0_1 = arith.constant 0 : index
    %c0_2 = arith.constant 0 : index
    %1 = vector.load %arg2[%c0_1, %c0_2] : memref<2x128xf32, #tpu.memory_space<vmem>>, vector<2x128xf32>
    %2 = vector.extract_strided_slice %0 {offsets = [0, 0], sizes = [8, 1], strides = [1, 1]} : vector<8x2xf32> to vector<8x1xf32>
    %3 = vector.extract_strided_slice %1 {offsets = [0, 0], sizes = [1, 128], strides = [1, 1]} : vector<2x128xf32> to vector<1x128xf32>
    %4 = vector.broadcast %2 : vector<8x1xf32> to vector<8x128xf32>
    %5 = vector.broadcast %3 : vector<1x128xf32> to vector<8x128xf32>
    %6 = arith.mulf %4, %5 : vector<8x128xf32>
    %7 = vector.extract_strided_slice %0 {offsets = [0, 1], sizes = [8, 1], strides = [1, 1]} : vector<8x2xf32> to vector<8x1xf32>
    %8 = vector.extract_strided_slice %1 {offsets = [1, 0], sizes = [1, 128], strides = [1, 1]} : vector<2x128xf32> to vector<1x128xf32>
    %9 = vector.broadcast %7 : vector<8x1xf32> to vector<8x128xf32>
    %10 = vector.broadcast %8 : vector<1x128xf32> to vector<8x128xf32>
    %11 = arith.mulf %9, %10 : vector<8x128xf32>
    %12 = arith.addf %6, %11 : vector<8x128xf32>
    %c0_3 = arith.constant 0 : index
    %c0_4 = arith.constant 0 : index
    %13 = vector.load %arg3[%c0_3, %c0_4] : memref<1x128xf32, #tpu.memory_space<vmem>>, vector<1x128xf32>
    %14 = vector.broadcast %13 : vector<1x128xf32> to vector<8x128xf32>
    %15 = arith.addf %12, %14 : vector<8x128xf32>
    %cst = arith.constant 0.000000e+00 : f32
    %16 = vector.broadcast %cst : f32 to vector<8x128xf32>
    %17 = arith.maximumf %15, %16 : vector<8x128xf32>
    %c0_5 = arith.constant 0 : index
    %c0_6 = arith.constant 0 : index
    %18 = vector.load %arg4[%c0_5, %c0_6] : memref<128x256xf32, #tpu.memory_space<vmem>>, vector<128x256xf32>
    %cst_7 = arith.constant dense<0.000000e+00> : vector<8x256xf32>
    %19 = tpu.matmul %17, %18, %cst_7 {dimension_numbers = #tpu.dot_dimension_numbers<[1], [0], [0], [1], [0, 0, 1, 1], [], []>} : vector<8x128xf32>, vector<128x256xf32>, vector<8x256xf32> -> vector<8x256xf32>
    %c0_8 = arith.constant 0 : index
    %c0_9 = arith.constant 0 : index
    %20 = vector.load %arg5[%c0_8, %c0_9] : memref<1x256xf32, #tpu.memory_space<vmem>>, vector<1x256xf32>
    %21 = vector.broadcast %20 : vector<1x256xf32> to vector<8x256xf32>
    %22 = arith.addf %19, %21 : vector<8x256xf32>
    %cst_10 = arith.constant 0.000000e+00 : f32
    %23 = vector.broadcast %cst_10 : f32 to vector<8x256xf32>
    %24 = arith.maximumf %22, %23 : vector<8x256xf32>
    %c0_11 = arith.constant 0 : index
    %c0_12 = arith.constant 0 : index
    %25 = vector.load %arg6[%c0_11, %c0_12] : memref<256x128xf32, #tpu.memory_space<vmem>>, vector<256x128xf32>
    %cst_13 = arith.constant dense<0.000000e+00> : vector<8x128xf32>
    %26 = tpu.matmul %24, %25, %cst_13 {dimension_numbers = #tpu.dot_dimension_numbers<[1], [0], [0], [1], [0, 0, 1, 1], [], []>} : vector<8x256xf32>, vector<256x128xf32>, vector<8x128xf32> -> vector<8x128xf32>
    %c0_14 = arith.constant 0 : index
    %c0_15 = arith.constant 0 : index
    %27 = vector.load %arg7[%c0_14, %c0_15] : memref<1x128xf32, #tpu.memory_space<vmem>>, vector<1x128xf32>
    %28 = vector.broadcast %27 : vector<1x128xf32> to vector<8x128xf32>
    %29 = arith.addf %26, %28 : vector<8x128xf32>
    %cst_16 = arith.constant dense<0xFF800000> : vector<8xf32>
    %30 = vector.multi_reduction <maximumf>, %29, %cst_16 [1] : vector<8x128xf32> to vector<8xf32>
    %31 = vector.shape_cast %30 : vector<8xf32> to vector<8x1xf32>
    %32 = vector.broadcast %31 : vector<8x1xf32> to vector<8x128xf32>
    %33 = arith.subf %29, %32 : vector<8x128xf32>
    %34 = math.exp %33 : vector<8x128xf32>
    %cst_17 = arith.constant dense<0.000000e+00> : vector<8xf32>
    %35 = vector.multi_reduction <add>, %34, %cst_17 [1] : vector<8x128xf32> to vector<8xf32>
    %36 = vector.shape_cast %35 : vector<8xf32> to vector<8x1xf32>
    %37 = tpu.reciprocal %36 : vector<8x1xf32> -> vector<8x1xf32>
    %38 = vector.extract_strided_slice %34 {offsets = [0, 0], sizes = [8, 7], strides = [1, 1]} : vector<8x128xf32> to vector<8x7xf32>
    %39 = vector.broadcast %37 : vector<8x1xf32> to vector<8x7xf32>
    %40 = arith.mulf %38, %39 : vector<8x7xf32>
    %c0_18 = arith.constant 0 : index
    %c0_19 = arith.constant 0 : index
    %41 = vector.load %arg8[%c0_18, %c0_19] : memref<8x7xf32, #tpu.memory_space<vmem>>, vector<8x7xf32>
    tpu.vector_store %arg8[%c0_18, %c0_19], %40 {strides = array<i32>} : memref<8x7xf32, #tpu.memory_space<vmem>>, vector<8x7xf32>,
    return
  }
  func.func @transform_0(%arg0: i32) -> (i32, i32) {
    %c0_i32 = arith.constant 0 : i32
    %c0_i32_0 = arith.constant 0 : i32
    return %arg0, %c0_i32 : i32, i32
  }
  func.func @transform_1(%arg0: i32) -> (i32, i32) {
    %c0_i32 = arith.constant 0 : i32
    %c0_i32_0 = arith.constant 0 : i32
    %c0_i32_1 = arith.constant 0 : i32
    return %c0_i32, %c0_i32_0 : i32, i32
  }
  func.func @transform_2(%arg0: i32) -> (i32, i32) {
    %c0_i32 = arith.constant 0 : i32
    %c0_i32_0 = arith.constant 0 : i32
    %c0_i32_1 = arith.constant 0 : i32
    return %c0_i32, %c0_i32_0 : i32, i32
  }
  func.func @transform_3(%arg0: i32) -> (i32, i32) {
    %c0_i32 = arith.constant 0 : i32
    %c0_i32_0 = arith.constant 0 : i32
    %c0_i32_1 = arith.constant 0 : i32
    return %c0_i32, %c0_i32_0 : i32, i32
  }
  func.func @transform_4(%arg0: i32) -> (i32, i32) {
    %c0_i32 = arith.constant 0 : i32
    %c0_i32_0 = arith.constant 0 : i32
    %c0_i32_1 = arith.constant 0 : i32
    return %c0_i32, %c0_i32_0 : i32, i32
  }
  func.func @transform_5(%arg0: i32) -> (i32, i32) {
    %c0_i32 = arith.constant 0 : i32
    %c0_i32_0 = arith.constant 0 : i32
    %c0_i32_1 = arith.constant 0 : i32
    return %c0_i32, %c0_i32_0 : i32, i32
  }
  func.func @transform_6(%arg0: i32) -> (i32, i32) {
    %c0_i32 = arith.constant 0 : i32
    %c0_i32_0 = arith.constant 0 : i32
    %c0_i32_1 = arith.constant 0 : i32
    return %c0_i32, %c0_i32_0 : i32, i32
  }
  func.func @transform_7(%arg0: i32) -> (i32, i32) {
    %c0_i32 = arith.constant 0 : i32
    %c0_i32_0 = arith.constant 0 : i32
    return %arg0, %c0_i32 : i32, i32
  }
}

</mosaic_0001>

<llo_original>
// kernel: policy_forward.1
$region0: #{policy_forward.1}
  #allocation0 [shape = 'u32[]', space=smem, size = 0x4, offset = 0x4, fixed_abs, tag = 'smem constant byte address 0x4 - core index']
  #allocation1 [shape = 'u32[72,128]{1,0:T(1,128)}', space=vmem, size = 0x9000, scoped, tag = 'internal scratch']
  %s0 = inlined_call_operand.vmem [shape: f32[8,2], index: 0, kind: input, shape index: {}]
  %s1 = inlined_call_operand.vmem [shape: f32[2,128], index: 1, kind: input, shape index: {}]
  %s2 = inlined_call_operand.vmem [shape: f32[1,128], index: 2, kind: input, shape index: {}]
  %s3 = inlined_call_operand.hbm [shape: f32[128,256], index: 3, kind: input, shape index: {}]
  %s4 = inlined_call_operand.vmem [shape: f32[1,256], index: 4, kind: input, shape index: {}]
  %s5 = inlined_call_operand.hbm [shape: f32[256,128], index: 5, kind: input, shape index: {}]
  %s6 = inlined_call_operand.vmem [shape: f32[1,128], index: 6, kind: input, shape index: {}]
  %s7 = inlined_call_operand.hbm [shape: f32[8,7], index: 7, kind: output, shape index: {}]
  %s8 = sld [smem:[#allocation0]]
  $region46: #{policy_forward.1} parent=0
    _
  %s10 = ssub.s32 1, %s8
  %s11 = scalar_select 0, %s10, %s8
  $region1: #{policy_forward.1} parent=0
    #allocation2 [shape = 'u8[131072]{0}', space=vmem, size = 0x20000, scoped, tag = 'input window, operand 3, single buffered']
    #allocation3 [shape = 's32[1]{0}', space=sflag, size = 0x4, scoped, tag = 'scoped memory for policy_forward.1']
    #allocation4 [shape = 's32[1]{0}', space=sflag, size = 0x4, scoped, tag = 'scoped memory for policy_forward.1']
    #allocation5 [shape = 'u8[131072]{0}', space=vmem, size = 0x20000, scoped, tag = 'input window, operand 5, single buffered']
    #allocation6 [shape = 's32[1]{0}', space=sflag, size = 0x4, scoped, tag = 'scoped memory for policy_forward.1']
    #allocation7 [shape = 'u8[4096]{0}', space=vmem, size = 0x1000, scoped, tag = 'output window, operand 0, single buffered']
    %12 = vsyncpa [#allocation3], 0
    %13 = vsyncpa [#allocation6], 0
    %14 = vsyncpa [#allocation4], 0
    // Predicated region
    $region2: #{policy_forward.1} parent=1 // pred_check
      _
    $region3: #{policy_forward.1} parent=1 // pred_check_branch
      %16 = sbr.rel (0) target = $region5
    $region4: #{policy_forward.1} parent=1 // pred_region
      _
    $region5: #{policy_forward.1} parent=1 // pred_fallthru
      _
    // Predicated region
    $region6: #{policy_forward.1} parent=1 // pred_check
      _
    $region7: #{policy_forward.1} parent=1 // pred_check_branch
      %18 = sbr.rel (0) target = $region9
    $region8: #{policy_forward.1} parent=1 // pred_region
      _
    $region9: #{policy_forward.1} parent=1 // pred_fallthru
      _
    // Predicated region
    $region10: #{policy_forward.1} parent=1 // pred_check
      _
    $region11: #{policy_forward.1} parent=1 // pred_check_branch
      %20 = sbr.rel (0) target = $region13
    $region12: #{policy_forward.1} parent=1 // pred_region
      _
    $region13: #{policy_forward.1} parent=1 // pred_fallthru
      _
    // Predicated region
    $region14: #{policy_forward.1} parent=1 // pred_check
      _
    $region15: #{policy_forward.1} parent=1 // pred_check_branch
      %22 = sbr.rel (0) target = $region17
    $region16: #{policy_forward.1} parent=1 // pred_region
      %24 = vsyncadd [#allocation3], 0
      %s25 = sshll.u32 %s3, 4
      %s26 = int_to_ptr.hbm [resolvable:$true] %s25
      %s27 = sshll.u32 [#allocation2], 4
      %s28 = int_to_ptr.vmem [resolvable:$true] %s27
      %33 = dma.hbm_to_vmem [thread:$0]  %s26, 4096, %s28, [#allocation3], 256, 256, 16
    $region17: #{policy_forward.1} parent=1 // pred_fallthru
      _
    // Predicated region
    $region18: #{policy_forward.1} parent=1 // pred_check
      _
    $region19: #{policy_forward.1} parent=1 // pred_check_branch
      %35 = sbr.rel (0) target = $region21
    $region20: #{policy_forward.1} parent=1 // pred_region
      _
    $region21: #{policy_forward.1} parent=1 // pred_fallthru
      _
    // Predicated region
    $region22: #{policy_forward.1} parent=1 // pred_check
      _
    $region23: #{policy_forward.1} parent=1 // pred_check_branch
      %37 = sbr.rel (0) target = $region25
    $region24: #{policy_forward.1} parent=1 // pred_region
      %39 = vsyncadd [#allocation6], 0
      %s40 = sshll.u32 %s5, 4
      %s41 = int_to_ptr.hbm [resolvable:$true] %s40
      %s42 = sshll.u32 [#allocation5], 4
      %s43 = int_to_ptr.vmem [resolvable:$true] %s42
      %48 = dma.hbm_to_vmem [thread:$0]  %s41, 4096, %s43, [#allocation6], 128, 128, 8
    $region25: #{policy_forward.1} parent=1 // pred_fallthru
      _
    // Predicated region
    $region26: #{policy_forward.1} parent=1 // pred_check
      _
    $region27: #{policy_forward.1} parent=1 // pred_check_branch
      %50 = sbr.rel (0) target = $region29
    $region28: #{policy_forward.1} parent=1 // pred_region
      _
    $region29: #{policy_forward.1} parent=1 // pred_fallthru
      _
    // Predicated region
    $region30: #{policy_forward.1} parent=1 // pred_check
      _
    $region31: #{policy_forward.1} parent=1 // pred_check_branch
      %52 = sbr.rel (0) target = $region33
    $region32: #{policy_forward.1} parent=1 // pred_region
      %54 = dma.done [#allocation3], 4096
    $region33: #{policy_forward.1} parent=1 // pred_fallthru
      _
    // Predicated region
    $region34: #{policy_forward.1} parent=1 // pred_check
      _
    $region35: #{policy_forward.1} parent=1 // pred_check_branch
      %56 = sbr.rel (0) target = $region37
    $region36: #{policy_forward.1} parent=1 // pred_region
      %58 = dma.done [#allocation6], 4096
    $region37: #{policy_forward.1} parent=1 // pred_fallthru
      _
    %v59 = vld [vmem:[%s0] sm:$0xff]
    %v60 = vld [vmem:[%s1] sm:$0x3]
    %62 = vset.pattern.permute.xlu0 0
    %63 = vperm.xlu0 %62, %v59
    %v64 = vpop.permute.xlu0 %63
    %v66 = vperm.slane %v60, 0
    %v67 = vmul.f32 %v64, %v66
    %68 = vset.pattern.permute.xlu0 1
    %69 = vperm.xlu0 %68, %v59
    %v70 = vpop.permute.xlu0 %69
    %v72 = vperm.slane %v60, 1
    %v73 = vmul.f32 %v70, %v72
    %v74 = vadd.f32 %v67, %v73
    %v75 = vld [vmem:[%s2] sm:$0x1]
    %v77 = vperm.slane %v75, 0
    %v79 = vadd.f32 %v74, %v77
    %v80 = vmax.f32 %v79, 0.0
    %v81 = vld [vmem:[#allocation2] sm:$0xff]
    %v82 = vld [vmem:[#allocation2 + $0x8] sm:$0xff]
    %v83 = vld [vmem:[#allocation2 + $0x10] sm:$0xff]
    %v84 = vld [vmem:[#allocation2 + $0x18] sm:$0xff]
    %v85 = vld [vmem:[#allocation2 + $0x20] sm:$0xff]
    %v86 = vld [vmem:[#allocation2 + $0x28] sm:$0xff]
    %v87 = vld [vmem:[#allocation2 + $0x30] sm:$0xff]
    %v88 = vld [vmem:[#allocation2 + $0x38] sm:$0xff]
    %v89 = vld [vmem:[#allocation2 + $0x40] sm:$0xff]
    %v90 = vld [vmem:[#allocation2 + $0x48] sm:$0xff]
    %v91 = vld [vmem:[#allocation2 + $0x50] sm:$0xff]
    %v92 = vld [vmem:[#allocation2 + $0x58] sm:$0xff]
    %v93 = vld [vmem:[#allocation2 + $0x60] sm:$0xff]
    %v94 = vld [vmem:[#allocation2 + $0x68] sm:$0xff]
    %v95 = vld [vmem:[#allocation2 + $0x70] sm:$0xff]
    %v96 = vld [vmem:[#allocation2 + $0x78] sm:$0xff]
    %v97 = vld [vmem:[#allocation2 + $0x80] sm:$0xff]
    %v98 = vld [vmem:[#allocation2 + $0x88] sm:$0xff]
    %v99 = vld [vmem:[#allocation2 + $0x90] sm:$0xff]
    %v100 = vld [vmem:[#allocation2 + $0x98] sm:$0xff]
    %v101 = vld [vmem:[#allocation2 + $0xa0] sm:$0xff]
    %v102 = vld [vmem:[#allocation2 + $0xa8] sm:$0xff]
    %v103 = vld [vmem:[#allocation2 + $0xb0] sm:$0xff]
    %v104 = vld [vmem:[#allocation2 + $0xb8] sm:$0xff]
    %v105 = vld [vmem:[#allocation2 + $0xc0] sm:$0xff]
    %v106 = vld [vmem:[#allocation2 + $0xc8] sm:$0xff]
    %v107 = vld [vmem:[#allocation2 + $0xd0] sm:$0xff]
    %v108 = vld [vmem:[#allocation2 + $0xd8] sm:$0xff]
    %v109 = vld [vmem:[#allocation2 + $0xe0] sm:$0xff]
    %v110 = vld [vmem:[#allocation2 + $0xe8] sm:$0xff]
    %v111 = vld [vmem:[#allocation2 + $0xf0] sm:$0xff]
    %v112 = vld [vmem:[#allocation2 + $0xf8] sm:$0xff]
    %v113 = vld [vmem:[%s4] sm:$0x3]
    %v115 = vperm.slane %v113, 0
    %v116 = vperm.slane %v113, 1
    %119 = vmatpush.msra.mxu0 %v111
    %120 = vmatpush.msra.mxu0 %v109
    %121 = vmatpush.msra.mxu0 %v107
    %122 = vmatpush.msra.mxu0 %v105
    %123 = vmatpush.msra.mxu0 %v103
    %124 = vmatpush.msra.mxu0 %v101
    %125 = vmatpush.msra.mxu0 %v99
    %126 = vmatpush.msra.mxu0 %v97
    %127 = vmatpush.msra.mxu0 %v95
    %128 = vmatpush.msra.mxu0 %v93
    %129 = vmatpush.msra.mxu0 %v91
    %130 = vmatpush.msra.mxu0 %v89
    %131 = vmatpush.msra.mxu0 %v87
    %132 = vmatpush.msra.mxu0 %v85
    %133 = vmatpush.msra.mxu0 %v83
    %134 = vmatpush.msra.mxu0 %v81
    %135 = vmatmul.f32.gmra.mxu0 %v80
    %v136 = vpop.f32.mrf.mxu0
    %v137 = vadd.f32 %v115, %v136
    %138 = vdwg.mxu0
    %139 = vmatpush.msra.mxu0 %v112
    %140 = vmatpush.msra.mxu0 %v110
    %141 = vmatpush.msra.mxu0 %v108
    %142 = vmatpush.msra.mxu0 %v106
    %143 = vmatpush.msra.mxu0 %v104
    %144 = vmatpush.msra.mxu0 %v102
    %145 = vmatpush.msra.mxu0 %v100
    %146 = vmatpush.msra.mxu0 %v98
    %147 = vmatpush.msra.mxu0 %v96
    %148 = vmatpush.msra.mxu0 %v94
    %149 = vmatpush.msra.mxu0 %v92
    %150 = vmatpush.msra.mxu0 %v90
    %151 = vmatpush.msra.mxu0 %v88
    %152 = vmatpush.msra.mxu0 %v86
    %153 = vmatpush.msra.mxu0 %v84
    %154 = vmatpush.msra.mxu0 %v82
    %155 = vmatmul.f32.gmra.mxu0 %v80
    %v156 = vpop.f32.mrf.mxu0
    %v157 = vadd.f32 %v116, %v156
    %158 = vdwg.mxu0
    %v159 = vmax.f32 %v137, 0.0
    %v160 = vmax.f32 %v157, 0.0
    %v161 = vld [vmem:[#allocation5] sm:$0xff]
    %v162 = vld [vmem:[#allocation5 + $0x8] sm:$0xff]
    %v163 = vld [vmem:[#allocation5 + $0x10] sm:$0xff]
    %v164 = vld [vmem:[#allocation5 + $0x18] sm:$0xff]
    %v165 = vld [vmem:[#allocation5 + $0x20] sm:$0xff]
    %v166 = vld [vmem:[#allocation5 + $0x28] sm:$0xff]
    %v167 = vld [vmem:[#allocation5 + $0x30] sm:$0xff]
    %v168 = vld [vmem:[#allocation5 + $0x38] sm:$0xff]
    %v169 = vld [vmem:[#allocation5 + $0x40] sm:$0xff]
    %v170 = vld [vmem:[#allocation5 + $0x48] sm:$0xff]
    %v171 = vld [vmem:[#allocation5 + $0x50] sm:$0xff]
    %v172 = vld [vmem:[#allocation5 + $0x58] sm:$0xff]
    %v173 = vld [vmem:[#allocation5 + $0x60] sm:$0xff]
    %v174 = vld [vmem:[#allocation5 + $0x68] sm:$0xff]
    %v175 = vld [vmem:[#allocation5 + $0x70] sm:$0xff]
    %v176 = vld [vmem:[#allocation5 + $0x78] sm:$0xff]
    %v177 = vld [vmem:[#allocation5 + $0x80] sm:$0xff]
    %v178 = vld [vmem:[#allocation5 + $0x88] sm:$0xff]
    %v179 = vld [vmem:[#allocation5 + $0x90] sm:$0xff]
    %v180 = vld [vmem:[#allocation5 + $0x98] sm:$0xff]
    %v181 = vld [vmem:[#allocation5 + $0xa0] sm:$0xff]
    %v182 = vld [vmem:[#allocation5 + $0xa8] sm:$0xff]
    %v183 = vld [vmem:[#allocation5 + $0xb0] sm:$0xff]
    %v184 = vld [vmem:[#allocation5 + $0xb8] sm:$0xff]
    %v185 = vld [vmem:[#allocation5 + $0xc0] sm:$0xff]
    %v186 = vld [vmem:[#allocation5 + $0xc8] sm:$0xff]
    %v187 = vld [vmem:[#allocation5 + $0xd0] sm:$0xff]
    %v188 = vld [vmem:[#allocation5 + $0xd8] sm:$0xff]
    %v189 = vld [vmem:[#allocation5 + $0xe0] sm:$0xff]
    %v190 = vld [vmem:[#allocation5 + $0xe8] sm:$0xff]
    %v191 = vld [vmem:[#allocation5 + $0xf0] sm:$0xff]
    %v192 = vld [vmem:[#allocation5 + $0xf8] sm:$0xff]
    %v193 = vld [vmem:[%s6] sm:$0x1]
    %v195 = vperm.slane %v193, 0
    %197 = vmatpush.msra.mxu0 %v176
    %198 = vmatpush.msra.mxu0 %v175
    %199 = vmatpush.msra.mxu0 %v174
    %200 = vmatpush.msra.mxu0 %v173
    %201 = vmatpush.msra.mxu0 %v172
    %202 = vmatpush.msra.mxu0 %v171
    %203 = vmatpush.msra.mxu0 %v170
    %204 = vmatpush.msra.mxu0 %v169
    %205 = vmatpush.msra.mxu0 %v168
    %206 = vmatpush.msra.mxu0 %v167
    %207 = vmatpush.msra.mxu0 %v166
    %208 = vmatpush.msra.mxu0 %v165
    %209 = vmatpush.msra.mxu0 %v164
    %210 = vmatpush.msra.mxu0 %v163
    %211 = vmatpush.msra.mxu0 %v162
    %212 = vmatpush.msra.mxu0 %v161
    %213 = vmatmul.f32.gmra.mxu0 %v159
    %v214 = vpop.f32.mrf.mxu0
    %v215 = vadd.f32 %v195, %v214
    %216 = vdwg.mxu0
    %217 = vmatpush.msra.mxu0 %v192
    %218 = vmatpush.msra.mxu0 %v191
    %219 = vmatpush.msra.mxu0 %v190
    %220 = vmatpush.msra.mxu0 %v189
    %221 = vmatpush.msra.mxu0 %v188
    %222 = vmatpush.msra.mxu0 %v187
    %223 = vmatpush.msra.mxu0 %v186
    %224 = vmatpush.msra.mxu0 %v185
    %225 = vmatpush.msra.mxu0 %v184
    %226 = vmatpush.msra.mxu0 %v183
    %227 = vmatpush.msra.mxu0 %v182
    %228 = vmatpush.msra.mxu0 %v181
    %229 = vmatpush.msra.mxu0 %v180
    %230 = vmatpush.msra.mxu0 %v179
    %231 = vmatpush.msra.mxu0 %v178
    %232 = vmatpush.msra.mxu0 %v177
    %233 = vmatmul.f32.gmra.mxu0 %v160
    %v234 = vpop.f32.mrf.mxu0
    %v235 = vadd.f32 %v215, %v234
    %236 = vdwg.mxu0
    %237 = vmax.xlane.f32.xlu0 %v235
    %v238 = vpop.xlane.xlu0 %237
    %v239 = vsub.f32 %v235, %v238
    %v240 = vmul.f32 %v239, 1.442695
    %v241 = vpow.pop %v240
    %242 = vadd.xlane.f32.xlu0 %v241
    %v243 = vpop.xlane.xlu0 %242
    %v244 = vrcp.pop %v243
    %v245 = vmul.f32 %v243, %v244
    %v246 = vsub.f32 1.0, %v245
    %v247 = vmul.f32 %v244, %v246
    %v248 = vadd.f32 %v244, %v247
    %vm249 = vweird.f32 %v243
    %vm250 = vweird.f32 %v244
    %vm251 = vmor %vm249, %vm250
    %v252 = vsel %vm251, %v244, %v248
    %v253 = vand.u32 2147483647, %v243
    %vm254 = vcmp.eq.f32.partialorder %v253, 8.507059e+37
    %v255 = vand.u32 %v243, 2147483648
    %v256 = vor.u32 1.1754944e-38, %v255
    %v257 = vsel %vm254, %v256, %v252
    %v258 = vmul.f32 %v241, %v257
    %vm259 = vcmask 56320
    %260 = vst.msk [vmem:[#allocation7] sm:$0xff] %vm259, %v258
    // Predicated region
    $region38: #{policy_forward.1} parent=1 // pred_check
      _
    $region39: #{policy_forward.1} parent=1 // pred_check_branch
      %262 = sbr.rel (0) target = $region41
    $region40: #{policy_forward.1} parent=1 // pred_region
      %264 = vsyncadd [#allocation4], 0
      %s266 = sshll.u32 [#allocation7], 4
      %s267 = int_to_ptr.vmem [resolvable:$true] %s266
      %s268 = sshll.u32 %s7, 4
      %s269 = int_to_ptr.hbm [resolvable:$true] %s268
      %271 = dma.vmem_to_hbm [thread:$0]  %s267, 128, %s269, [#allocation4]
    $region41: #{policy_forward.1} parent=1 // pred_fallthru
      _
    // Predicated region
    $region42: #{policy_forward.1} parent=1 // pred_check
      _
    $region43: #{policy_forward.1} parent=1 // pred_check_branch
      %273 = sbr.rel (0) target = $region45
    $region44: #{policy_forward.1} parent=1 // pred_region
      %275 = dma.done [#allocation4], 128
    $region45: #{policy_forward.1} parent=1 // pred_fallthru
      _
    %276 = vsyncpa [#allocation3], 1
    %277 = vsyncpa [#allocation6], 1
    %278 = vsyncpa [#allocation4], 1

</llo_original>
